<compile_context>
chip_gen: v5e
topology: v5e:2x2
jax: 0.10.0
libtpu: 0.0.40
codegen_flags: <defaults>
</compile_context>

<pallas_src>
import functools

import numpy as np
import jax
import jax.numpy as jnp
from jax import lax
from jax.experimental import pallas as pl
from jax.experimental.pallas import tpu as pltpu


def _eps_sup_infonce_kernel(x_ref, xt_ref, lab_col_ref, lab_row_ref,
                            inv_cnt_ref, out_ref, *, temperature, epsilon):
    tm = x_ref.shape[0]          # rows in this strip
    n = xt_ref.shape[1]          # total number of samples (columns)
    neg_inf = jnp.float32(-jnp.inf)

    # Fold 1/temperature into the small (TM, D) operand, then feed the MXU
    # bf16 (inputs are L2-normalized, precision loss is benign); accumulate f32.
    a = (x_ref[...].astype(jnp.float32) * jnp.float32(1.0 / temperature))
    a = a.astype(jnp.bfloat16)
    logits = jnp.dot(a, xt_ref[...], preferred_element_type=jnp.float32)  # (TM, N)

    # Masks.  lab_col is passed as a tiled (TM, 1) input (rather than derived
    # from the (1, N) vector) to avoid an in-kernel lane->sublane relayout;
    # the lane-padding waste is bounded to one (TM, 1) block, not O(N).
    lab_col = lab_col_ref[...]                       # (TM, 1) int32
    lab_row = lab_row_ref[...]                       # (1, N)  int32
    same = lab_col == lab_row                        # (TM, N)
    diff = jnp.logical_not(same)
    row_base = pl.program_id(0) * tm
    gid_row = lax.broadcasted_iota(jnp.int32, (tm, n), 0) + row_base
    gid_col = lax.broadcasted_iota(jnp.int32, (tm, n), 1)
    in_numer = jnp.logical_and(same, gid_row != gid_col)

    # Row-wise logsumexp over negatives (different-label entries).
    # NOTE: this substitutes torch's dim=0 reduction; valid only because the
    # logits and masks are exactly symmetric.
    neg_logits = jnp.where(diff, logits, neg_inf)
    row_max = jnp.max(neg_logits, axis=1, keepdims=True)          # (TM, 1)
    safe_max = jnp.where(row_max == neg_inf, 0.0, row_max)
    sumexp = jnp.sum(jnp.exp(neg_logits - safe_max), axis=1, keepdims=True)
    base = safe_max + jnp.log(sumexp)          # (TM, 1); -inf if row has no negatives

    # logaddexp(logits - eps, base) in log1p form: one exp per element.
    # hi is always finite (logits - eps is finite), so exp(lo - hi) is safe
    # (yields 0 when base == -inf).
    shifted = logits - jnp.float32(epsilon)
    hi = jnp.maximum(shifted, base)
    lo = jnp.minimum(shifted, base)
    lad = hi + jnp.log(1.0 + jnp.exp(lo - hi))

    # ce = -(numer_logits - log_denom), zero off the positive mask.
    ce = jnp.where(in_numer, lad - logits, 0.0)                    # (TM, N)

    # Column-sum first, then a single (1, N) multiply by the precomputed
    # 1/positive-count vector (instead of an N^2 broadcast divide).
    col_sum = jnp.sum(ce, axis=0, keepdims=True)                   # (1, N)
    partial = jnp.sum(col_sum * inv_cnt_ref[...], axis=1, keepdims=True)  # (1, 1)
    out_ref[...] = partial.reshape(1, 1, 1)


def multiview_eps_sup_infonce_loss(embeds, labels, temperature=0.07,
                                   epsilon=0.25, block_rows=None):
    """embeds: (B, V, D) float32, L2-normalized over D.  labels: (B,) int."""
    B, V, D = embeds.shape
    N = B * V

    x = embeds.reshape(N, D).astype(jnp.float32)          # (N, D) f32, tiled per strip
    xT = jnp.transpose(x).astype(jnp.bfloat16)            # (D, N) bf16, resident MXU operand
    lab = jnp.repeat(labels.astype(jnp.int32), V)          # repeat_interleave(V)
    lab_row = lab.reshape(1, N)
    lab_col = lab.reshape(N, 1)

    # Positives per column: V * multiplicity(label_b) - 1  (O(B^2) int work).
    mult_b = jnp.sum(labels[None, :] == labels[:, None], axis=1)   # (B,)
    count = jnp.repeat(V * mult_b - 1, V).astype(jnp.float32)      # (N,)
    # count == 0 (a label with no positives) -> inf here -> NaN in the loss,
    # which matches the PyTorch reference's 0/0 behavior.
    inv_count = (1.0 / count).reshape(1, N)

    # Row-strip size.  Default 128 is safe on v7x's 64 MiB VMEM; v5e/v6e can
    # pass block_rows=256..512 (optionally with vmem_limit_bytes raised).
    if block_rows is None:
        block_rows = N
        for cand in (128, 64, 32, 16, 8):
            if N % cand == 0:
                block_rows = cand
                break
    if block_rows != N:
        assert N % block_rows == 0 and block_rows % 8 == 0, (N, block_rows)
    num_tiles = N // block_rows

    kernel = functools.partial(_eps_sup_infonce_kernel,
                               temperature=temperature, epsilon=epsilon)
    partials = pl.pallas_call(
        kernel,
        grid=(num_tiles,),
        in_specs=[
            pl.BlockSpec((block_rows, D), lambda i: (i, 0)),   # row strip of x
            pl.BlockSpec((D, N), lambda i: (0, 0)),            # xT, resident
            pl.BlockSpec((block_rows, 1), lambda i: (i, 0)),   # strip row labels
            pl.BlockSpec((1, N), lambda i: (0, 0)),            # all column labels
            pl.BlockSpec((1, N), lambda i: (0, 0)),            # 1 / positive count
        ],
        out_specs=pl.BlockSpec((1, 1, 1), lambda i: (i, 0, 0)),
        out_shape=jax.ShapeDtypeStruct((num_tiles, 1, 1), jnp.float32),
        compiler_params=pltpu.CompilerParams(
            dimension_semantics=("parallel",)),
    )(x, xT, lab_col, lab_row, inv_count)

    return jnp.sum(partials) / jnp.float32(N)


def _reference_loss(embeds, labels, temperature=0.07, epsilon=0.25):
    """Pure-JAX f32 transcription of the PyTorch forward, for verification."""
    B, V, D = embeds.shape
    n = B * V
    x = embeds.reshape(n, D).astype(jnp.float32)
    lab = jnp.repeat(labels.astype(jnp.int32), V)
    logits = (x @ x.T) / temperature
    same = lab[:, None] == lab[None, :]
    denom = jnp.where(~same, logits, -jnp.inf)
    base_row = jax.scipy.special.logsumexp(denom, axis=0)
    base = base_row[:, None]
    in_numer = same & ~jnp.eye(n, dtype=bool)
    count = in_numer.sum(axis=0)
    numer = jnp.where(in_numer, logits, 0.0)
    log_denom = jnp.where(in_numer, jnp.logaddexp(logits - epsilon, base), 0.0)
    ce = -(numer - log_denom)
    return jnp.sum(ce / count) / n


if __name__ == "__main__":
    key = jax.random.PRNGKey(0)
    B, V, D = 8, 2, 32
    embeds = jax.random.normal(key, (B, V, D), dtype=jnp.float32)
    embeds = embeds / jnp.linalg.norm(embeds, axis=-1, keepdims=True)
    # Deterministic labels: 4 classes, each appearing twice (so every sample
    # has both positives and negatives).
    labels = jnp.array([0, 1, 2, 3, 0, 1, 2, 3], dtype=jnp.int32)

    # block_rows=8 -> 2-tile grid at N=16 (exercises the tiled path).
    loss = multiview_eps_sup_infonce_loss(embeds, labels, block_rows=8)
    loss = jax.block_until_ready(loss)

    ref = jax.block_until_ready(_reference_loss(embeds, labels))
    # Tolerance loosened vs the f32 reference because the matmul runs in bf16
    # and logit errors are amplified by 1/temperature before exp.
    assert np.allclose(np.asarray(loss), np.asarray(ref), rtol=2e-2, atol=2e-2), (
        float(loss), float(ref))
    print("KERNEL_OK")
</pallas_src>

<mosaic_0001>
module attributes {stable_mosaic.version = 11 : i64} {
  func.func @_eps_sup_infonce_kernel(%arg0: i32, %arg1: memref<8x32xf32, #tpu.memory_space<vmem>>, %arg2: memref<32x16xbf16, #tpu.memory_space<vmem>>, %arg3: memref<8x1xi32, #tpu.memory_space<vmem>>, %arg4: memref<1x16xi32, #tpu.memory_space<vmem>>, %arg5: memref<1x16xf32, #tpu.memory_space<vmem>>, %arg6: memref<1x1x1xf32, #tpu.memory_space<vmem>>) attributes {dimension_semantics = [#tpu.dimension_semantics<parallel>], iteration_bounds = array<i64: 2>, scalar_prefetch = 0 : i64, scratch_operands = 0 : i64, tpu.core_type = #tpu.core_type<tc>, window_params = [{transform_indices = @transform_0, window_bounds = array<i64: 8, 32>}, {pipeline_mode = #tpu.pipeline_mode<synchronous>, transform_indices = @transform_1, window_bounds = array<i64: 32, 16>}, {transform_indices = @transform_2, window_bounds = array<i64: 8, 1>}, {pipeline_mode = #tpu.pipeline_mode<synchronous>, transform_indices = @transform_3, window_bounds = array<i64: 1, 16>}, {pipeline_mode = #tpu.pipeline_mode<synchronous>, transform_indices = @transform_4, window_bounds = array<i64: 1, 16>}, {transform_indices = @transform_5, window_bounds = array<i64: 1, 1, 1>}]} {
    %c0 = arith.constant 0 : index
    %c0_0 = arith.constant 0 : index
    %0 = vector.load %arg1[%c0, %c0_0] : memref<8x32xf32, #tpu.memory_space<vmem>>, vector<8x32xf32>
    %cst = arith.constant 14.2857141 : f32
    %1 = vector.broadcast %cst : f32 to vector<8x32xf32>
    %2 = arith.mulf %0, %1 : vector<8x32xf32>
    %3 = arith.truncf %2 : vector<8x32xf32> to vector<8x32xbf16>
    %c0_1 = arith.constant 0 : index
    %c0_2 = arith.constant 0 : index
    %4 = vector.load %arg2[%c0_1, %c0_2] : memref<32x16xbf16, #tpu.memory_space<vmem>>, vector<32x16xbf16>
    %cst_3 = arith.constant dense<0.000000e+00> : vector<8x16xf32>
    %5 = tpu.matmul %3, %4, %cst_3 {dimension_numbers = #tpu.dot_dimension_numbers<[1], [0], [0], [1], [0, 0, 1, 1], [], []>} : vector<8x32xbf16>, vector<32x16xbf16>, vector<8x16xf32> -> vector<8x16xf32>
    %c0_4 = arith.constant 0 : index
    %c0_5 = arith.constant 0 : index
    %6 = vector.load %arg3[%c0_4, %c0_5] : memref<8x1xi32, #tpu.memory_space<vmem>>, vector<8x1xi32>
    %c0_6 = arith.constant 0 : index
    %c0_7 = arith.constant 0 : index
    %7 = vector.load %arg4[%c0_6, %c0_7] : memref<1x16xi32, #tpu.memory_space<vmem>>, vector<1x16xi32>
    %8 = vector.broadcast %6 : vector<8x1xi32> to vector<8x16xi32>
    %9 = vector.broadcast %7 : vector<1x16xi32> to vector<8x16xi32>
    %10 = arith.cmpi eq, %8, %9 : vector<8x16xi32>
    %cst_8 = arith.constant dense<true> : vector<8x16xi1>
    %11 = arith.xori %10, %cst_8 : vector<8x16xi1>
    %c8_i32 = arith.constant 8 : i32
    %12 = arith.muli %arg0, %c8_i32 : i32
    %13 = tpu.iota {dimensions = array<i32: 0>} : vector<8x16xi32>
    %14 = vector.broadcast %12 : i32 to vector<8x16xi32>
    %15 = arith.addi %13, %14 : vector<8x16xi32>
    %16 = tpu.iota {dimensions = array<i32: 1>} : vector<8x16xi32>
    %17 = arith.cmpi ne, %15, %16 : vector<8x16xi32>
    %18 = arith.andi %10, %17 : vector<8x16xi1>
    %cst_9 = arith.constant 0xFF800000 : f32
    %19 = vector.broadcast %cst_9 : f32 to vector<8x16xf32>
    %20 = arith.select %11, %5, %19 : vector<8x16xi1>, vector<8x16xf32>
    %cst_10 = arith.constant dense<0xFF800000> : vector<8xf32>
    %21 = vector.multi_reduction <maximumf>, %20, %cst_10 [1] : vector<8x16xf32> to vector<8xf32>
    %22 = vector.shape_cast %21 : vector<8xf32> to vector<8x1xf32>
    %cst_11 = arith.constant 0xFF800000 : f32
    %23 = vector.broadcast %cst_11 : f32 to vector<8x1xf32>
    %24 = arith.cmpf oeq, %22, %23 : vector<8x1xf32>
    %cst_12 = arith.constant 0.000000e+00 : f32
    %25 = vector.broadcast %cst_12 : f32 to vector<8x1xf32>
    %26 = arith.select %24, %25, %22 : vector<8x1xi1>, vector<8x1xf32>
    %27 = vector.broadcast %26 : vector<8x1xf32> to vector<8x16xf32>
    %28 = arith.subf %20, %27 : vector<8x16xf32>
    %29 = math.exp %28 : vector<8x16xf32>
    %cst_13 = arith.constant dense<0.000000e+00> : vector<8xf32>
    %30 = vector.multi_reduction <add>, %29, %cst_13 [1] : vector<8x16xf32> to vector<8xf32>
    %31 = vector.shape_cast %30 : vector<8xf32> to vector<8x1xf32>
    %32 = math.log %31 : vector<8x1xf32>
    %33 = arith.addf %26, %32 : vector<8x1xf32>
    %cst_14 = arith.constant 2.500000e-01 : f32
    %34 = vector.broadcast %cst_14 : f32 to vector<8x16xf32>
    %35 = arith.subf %5, %34 : vector<8x16xf32>
    %36 = vector.broadcast %33 : vector<8x1xf32> to vector<8x16xf32>
    %37 = arith.maximumf %35, %36 : vector<8x16xf32>
    %38 = vector.broadcast %33 : vector<8x1xf32> to vector<8x16xf32>
    %39 = arith.minimumf %35, %38 : vector<8x16xf32>
    %40 = arith.subf %39, %37 : vector<8x16xf32>
    %41 = math.exp %40 : vector<8x16xf32>
    %cst_15 = arith.constant 1.000000e+00 : f32
    %42 = vector.broadcast %cst_15 : f32 to vector<8x16xf32>
    %43 = arith.addf %42, %41 : vector<8x16xf32>
    %44 = math.log %43 : vector<8x16xf32>
    %45 = arith.addf %37, %44 : vector<8x16xf32>
    %46 = arith.subf %45, %5 : vector<8x16xf32>
    %cst_16 = arith.constant 0.000000e+00 : f32
    %47 = vector.broadcast %cst_16 : f32 to vector<8x16xf32>
    %48 = arith.select %18, %46, %47 : vector<8x16xi1>, vector<8x16xf32>
    %cst_17 = arith.constant dense<0.000000e+00> : vector<16xf32>
    %49 = vector.multi_reduction <add>, %48, %cst_17 [0] : vector<8x16xf32> to vector<16xf32>
    %50 = vector.shape_cast %49 : vector<16xf32> to vector<1x16xf32>
    %c0_18 = arith.constant 0 : index
    %c0_19 = arith.constant 0 : index
    %51 = vector.load %arg5[%c0_18, %c0_19] : memref<1x16xf32, #tpu.memory_space<vmem>>, vector<1x16xf32>
    %52 = arith.mulf %50, %51 : vector<1x16xf32>
    %cst_20 = arith.constant dense<0.000000e+00> : vector<1xf32>
    %53 = vector.multi_reduction <add>, %52, %cst_20 [1] : vector<1x16xf32> to vector<1xf32>
    %54 = vector.shape_cast %53 : vector<1xf32> to vector<1x1xf32>
    %55 = vector.shape_cast %54 : vector<1x1xf32> to vector<1x1x1xf32>
    %c0_21 = arith.constant 0 : index
    %c0_22 = arith.constant 0 : index
    %c0_23 = arith.constant 0 : index
    %56 = vector.load %arg6[%c0_21, %c0_22, %c0_23] : memref<1x1x1xf32, #tpu.memory_space<vmem>>, vector<1x1x1xf32>
    tpu.vector_store %arg6[%c0_21, %c0_22, %c0_23], %55 {strides = array<i32>} : memref<1x1x1xf32, #tpu.memory_space<vmem>>, vector<1x1x1xf32>,
    return
  }
  func.func @transform_0(%arg0: i32) -> (i32, i32) {
    %c0_i32 = arith.constant 0 : i32
    %c0_i32_0 = arith.constant 0 : i32
    return %arg0, %c0_i32 : i32, i32
  }
  func.func @transform_1(%arg0: i32) -> (i32, i32) {
    %c0_i32 = arith.constant 0 : i32
    %c0_i32_0 = arith.constant 0 : i32
    %c0_i32_1 = arith.constant 0 : i32
    return %c0_i32, %c0_i32_0 : i32, i32
  }
  func.func @transform_2(%arg0: i32) -> (i32, i32) {
    %c0_i32 = arith.constant 0 : i32
    %c0_i32_0 = arith.constant 0 : i32
    return %arg0, %c0_i32 : i32, i32
  }
  func.func @transform_3(%arg0: i32) -> (i32, i32) {
    %c0_i32 = arith.constant 0 : i32
    %c0_i32_0 = arith.constant 0 : i32
    %c0_i32_1 = arith.constant 0 : i32
    return %c0_i32, %c0_i32_0 : i32, i32
  }
  func.func @transform_4(%arg0: i32) -> (i32, i32) {
    %c0_i32 = arith.constant 0 : i32
    %c0_i32_0 = arith.constant 0 : i32
    %c0_i32_1 = arith.constant 0 : i32
    return %c0_i32, %c0_i32_0 : i32, i32
  }
  func.func @transform_5(%arg0: i32) -> (i32, i32, i32) {
    %c0_i32 = arith.constant 0 : i32
    %c0_i32_0 = arith.constant 0 : i32
    %c0_i32_1 = arith.constant 0 : i32
    return %arg0, %c0_i32, %c0_i32_0 : i32, i32, i32
  }
}

</mosaic_0001>

<llo_original>
// kernel: tpu_custom_call.1
$region0: #{tpu_custom_call.1}
  #allocation0 [shape = 'u32[]', space=smem, size = 0x4, offset = 0x4, fixed_abs, tag = 'smem constant byte address 0x4 - core index']
  #allocation1 [shape = 'u32[72,128]{1,0:T(1,128)}', space=vmem, size = 0x9000, scoped, tag = 'internal scratch']
  %s0 = inlined_call_operand.vmem [shape: f32[16,32], index: 0, kind: input, shape index: {}]
  %s1 = inlined_call_operand.vmem [shape: bf16[32,16], index: 1, kind: input, shape index: {}]
  %s2 = inlined_call_operand.vmem [shape: s32[16,1], index: 2, kind: input, shape index: {}]
  %s3 = inlined_call_operand.vmem [shape: s32[1,16], index: 3, kind: input, shape index: {}]
  %s4 = inlined_call_operand.vmem [shape: f32[1,16], index: 4, kind: input, shape index: {}]
  %s5 = inlined_call_operand.vmem [shape: f32[2,1,1], index: 5, kind: output, shape index: {}]
  %s6 = sld [smem:[#allocation0]]
  $region53: #{tpu_custom_call.1} parent=0
    _
  %s8 = ssub.s32 1, %s6
  %s9 = scalar_select 0, %s8, %s6
  loop: start=0, step=1, limit=4
  $region2: #{tpu_custom_call.1} parent=0 // loop_pre_header
    _
  $region3: #{tpu_custom_call.1} parent=0 // loop_header
    %s11 = sphi 0, %s15
    %p12 = scmp.ge.s32.totalorder %s11, 4
    %s21 = sphi 0, %s23
    %s24 = sphi 0, %s21
    %s25 = sphi 0, %s24
    %s41 = sphi 0, %s25
    %s45 = sphi 0, %s45
    %s47 = sphi 0, %s45
    %s48 = sphi 0, %s47
    %s62 = sphi 0, %s48
    %s68 = sphi 0, %s70
    %s71 = sphi 0, %s68
    %s72 = sphi 0, %s71
    %s88 = sphi 0, %s72
    %s92 = sphi 0, %s92
    %s94 = sphi 0, %s92
    %s95 = sphi 0, %s94
    %s109 = sphi 0, %s95
    %s113 = sphi 0, %s113
    %s115 = sphi 0, %s113
    %s116 = sphi 0, %s115
    %s130 = sphi 0, %s116
    %s136 = sphi 0, %s138
    %s139 = sphi 0, %s136
    %s140 = sphi 0, %s139
    %s156 = sphi 0, %s140
  $region4: #{tpu_custom_call.1} parent=0 // loop_header_branch
    %14 = sbr.rel (%p12) target = $region8
  $region5: #{tpu_custom_call.1} parent=0 // loop_body
    %s16 = ssub.s32 %s11, 1
    %s17 = ssub.s32 %s11, 2
    %s18 = sadd.s32 %s11, 1
    %s19 = ssub.s32 %s11, %s18
    %p20 = scmp.eq.s32.totalorder %s19, 0
    %s22 = sadd.s32 %s21, 1
    %s23 = scalar_select %p20, %s21, %s22
    %p26 = pneg %p20
    %p27 = scmp.eq.s32.totalorder %s11, 1
    %p28 = por %p26, %p27
    %p29 = scmp.ne.s32.totalorder %s21, %s24
    %p30 = scmp.eq.s32.totalorder %s11, 0
    %p31 = por %p29, %p30
    %p32 = scmp.ne.s32.totalorder %s21, %s24
    %p33 = scmp.eq.s32.totalorder %s16, 1
    %p34 = por %p32, %p33
    %p35 = scmp.ne.s32.totalorder %s24, %s25
    %p36 = scmp.eq.s32.totalorder %s16, 0
    %p37 = por %p35, %p36
    %p38 = scmp.ne.s32.totalorder %s24, %s25
    %p39 = scmp.eq.s32.totalorder %s17, 1
    %p40 = por %p38, %p39
    %p42 = scmp.ne.s32.totalorder %s25, %s41
    %p43 = scmp.eq.s32.totalorder %s17, 0
    %p44 = por %p42, %p43
    %s46 = sadd.s32 %s45, 1
    %p49 = scmp.eq.s32.totalorder %s11, 1
    %p50 = scmp.ne.s32.totalorder %s45, %s47
    %p51 = scmp.eq.s32.totalorder %s11, 0
    %p52 = por %p50, %p51
    %p53 = scmp.ne.s32.totalorder %s45, %s47
    %p54 = scmp.eq.s32.totalorder %s16, 1
    %p55 = por %p53, %p54
    %p56 = scmp.ne.s32.totalorder %s47, %s48
    %p57 = scmp.eq.s32.totalorder %s16, 0
    %p58 = por %p56, %p57
    %p59 = scmp.ne.s32.totalorder %s47, %s48
    %p60 = scmp.eq.s32.totalorder %s17, 1
    %p61 = por %p59, %p60
    %p63 = scmp.ne.s32.totalorder %s48, %s62
    %p64 = scmp.eq.s32.totalorder %s17, 0
    %p65 = por %p63, %p64
    %s66 = ssub.s32 %s11, %s18
    %p67 = scmp.eq.s32.totalorder %s66, 0
    %s69 = sadd.s32 %s68, 1
    %s70 = scalar_select %p67, %s68, %s69
    %p73 = pneg %p67
    %p74 = scmp.eq.s32.totalorder %s11, 1
    %p75 = por %p73, %p74
    %p76 = scmp.ne.s32.totalorder %s68, %s71
    %p77 = scmp.eq.s32.totalorder %s11, 0
    %p78 = por %p76, %p77
    %p79 = scmp.ne.s32.totalorder %s68, %s71
    %p80 = scmp.eq.s32.totalorder %s16, 1
    %p81 = por %p79, %p80
    %p82 = scmp.ne.s32.totalorder %s71, %s72
    %p83 = scmp.eq.s32.totalorder %s16, 0
    %p84 = por %p82, %p83
    %p85 = scmp.ne.s32.totalorder %s71, %s72
    %p86 = scmp.eq.s32.totalorder %s17, 1
    %p87 = por %p85, %p86
    %p89 = scmp.ne.s32.totalorder %s72, %s88
    %p90 = scmp.eq.s32.totalorder %s17, 0
    %p91 = por %p89, %p90
    %s93 = sadd.s32 %s92, 1
    %p96 = scmp.eq.s32.totalorder %s11, 1
    %p97 = scmp.ne.s32.totalorder %s92, %s94
    %p98 = scmp.eq.s32.totalorder %s11, 0
    %p99 = por %p97, %p98
    %p100 = scmp.ne.s32.totalorder %s92, %s94
    %p101 = scmp.eq.s32.totalorder %s16, 1
    %p102 = por %p100, %p101
    %p103 = scmp.ne.s32.totalorder %s94, %s95
    %p104 = scmp.eq.s32.totalorder %s16, 0
    %p105 = por %p103, %p104
    %p106 = scmp.ne.s32.totalorder %s94, %s95
    %p107 = scmp.eq.s32.totalorder %s17, 1
    %p108 = por %p106, %p107
    %p110 = scmp.ne.s32.totalorder %s95, %s109
    %p111 = scmp.eq.s32.totalorder %s17, 0
    %p112 = por %p110, %p111
    %s114 = sadd.s32 %s113, 1
    %p117 = scmp.eq.s32.totalorder %s11, 1
    %p118 = scmp.ne.s32.totalorder %s113, %s115
    %p119 = scmp.eq.s32.totalorder %s11, 0
    %p120 = por %p118, %p119
    %p121 = scmp.ne.s32.totalorder %s113, %s115
    %p122 = scmp.eq.s32.totalorder %s16, 1
    %p123 = por %p121, %p122
    %p124 = scmp.ne.s32.totalorder %s115, %s116
    %p125 = scmp.eq.s32.totalorder %s16, 0
    %p126 = por %p124, %p125
    %p127 = scmp.ne.s32.totalorder %s115, %s116
    %p128 = scmp.eq.s32.totalorder %s17, 1
    %p129 = por %p127, %p128
    %p131 = scmp.ne.s32.totalorder %s116, %s130
    %p132 = scmp.eq.s32.totalorder %s17, 0
    %p133 = por %p131, %p132
    %s134 = ssub.s32 %s11, %s18
    %p135 = scmp.eq.s32.totalorder %s134, 0
    %s137 = sadd.s32 %s136, 1
    %s138 = scalar_select %p135, %s136, %s137
    %p141 = pneg %p135
    %p142 = scmp.eq.s32.totalorder %s11, 1
    %p143 = por %p141, %p142
    %p144 = scmp.ne.s32.totalorder %s136, %s139
    %p145 = scmp.eq.s32.totalorder %s11, 0
    %p146 = por %p144, %p145
    %p147 = scmp.ne.s32.totalorder %s136, %s139
    %p148 = scmp.eq.s32.totalorder %s16, 1
    %p149 = por %p147, %p148
    %p150 = scmp.ne.s32.totalorder %s139, %s140
    %p151 = scmp.eq.s32.totalorder %s16, 0
    %p152 = por %p150, %p151
    %p153 = scmp.ne.s32.totalorder %s139, %s140
    %p154 = scmp.eq.s32.totalorder %s17, 1
    %p155 = por %p153, %p154
    %p157 = scmp.ne.s32.totalorder %s140, %s156
    %p158 = scmp.eq.s32.totalorder %s17, 0
    %p159 = por %p157, %p158
    %p160 = scmp.le.s32.totalorder 1, %s11
    %p161 = scmp.lt.s32.totalorder %s11, 3
    %p162 = pnand %p160, %p161
    %p163 = pneg %p162
    // Predicated region
    $region9: #{tpu_custom_call.1} parent=5 // pred_check
      _
    $region10: #{tpu_custom_call.1} parent=5 // pred_check_branch
      %165 = sbr.rel (%p162) target = $region12
    $region11: #{tpu_custom_call.1} parent=5 // pred_region
      %s166 = ssub.s32 %s11, 1
      // Predicated region
      $region13: #{tpu_custom_call.1} parent=11 // pred_check
        %p167 = pneg %p58
      $region14: #{tpu_custom_call.1} parent=11 // pred_check_branch
        %169 = sbr.rel (%p167) target = $region16
      $region15: #{tpu_custom_call.1} parent=11 // pred_region
        _
      $region16: #{tpu_custom_call.1} parent=11 // pred_fallthru
        _
      // Predicated region
      $region17: #{tpu_custom_call.1} parent=11 // pred_check
        %p170 = pneg %p105
      $region18: #{tpu_custom_call.1} parent=11 // pred_check_branch
        %172 = sbr.rel (%p170) target = $region20
      $region19: #{tpu_custom_call.1} parent=11 // pred_region
        _
      $region20: #{tpu_custom_call.1} parent=11 // pred_fallthru
        _
      // Predicated region
      $region21: #{tpu_custom_call.1} parent=11 // pred_check
        %p173 = pneg %p126
      $region22: #{tpu_custom_call.1} parent=11 // pred_check_branch
        %175 = sbr.rel (%p173) target = $region24
      $region23: #{tpu_custom_call.1} parent=11 // pred_region
        _
      $region24: #{tpu_custom_call.1} parent=11 // pred_fallthru
        _
    $region12: #{tpu_custom_call.1} parent=5 // pred_fallthru
      _
    %p176 = scmp.lt.s32.totalorder %s11, 2
    // Predicated region
    $region25: #{tpu_custom_call.1} parent=5 // pred_check
      %p177 = pneg %p176
    $region26: #{tpu_custom_call.1} parent=5 // pred_check_branch
      %179 = sbr.rel (%p177) target = $region28
    $region27: #{tpu_custom_call.1} parent=5 // pred_region
      // Predicated region
      $region29: #{tpu_custom_call.1} parent=27 // pred_check
        %p180 = pneg %p31
      $region30: #{tpu_custom_call.1} parent=27 // pred_check_branch
        %182 = sbr.rel (%p180) target = $region32
      $region31: #{tpu_custom_call.1} parent=27 // pred_region
        %p183 = scmp.lt.s32.totalorder %s11, 1
        %s184 = scalar_select %p183, %s11, 1
        %s185 = smul.addr %s184, 8
        %s186 = scalar_lea.vmem %s0, %s185
      $region32: #{tpu_custom_call.1} parent=27 // pred_fallthru
        _
      // Predicated region
      $region33: #{tpu_custom_call.1} parent=27 // pred_check
        %p187 = pneg %p78
      $region34: #{tpu_custom_call.1} parent=27 // pred_check_branch
        %189 = sbr.rel (%p187) target = $region36
      $region35: #{tpu_custom_call.1} parent=27 // pred_region
        %p190 = scmp.lt.s32.totalorder %s11, 1
        %s191 = scalar_select %p190, %s11, 1
        %s192 = smul.addr %s191, 8
        %s193 = scalar_lea.vmem %s2, %s192
      $region36: #{tpu_custom_call.1} parent=27 // pred_fallthru
        _
    $region28: #{tpu_custom_call.1} parent=5 // pred_fallthru
      _
    %p194 = scmp.le.s32.totalorder 1, %s11
    %p195 = scmp.lt.s32.totalorder %s11, 3
    %p196 = pnand %p194, %p195
    %p197 = pneg %p196
    // Predicated region
    $region37: #{tpu_custom_call.1} parent=5 // pred_check
      _
    $region38: #{tpu_custom_call.1} parent=5 // pred_check_branch
      %199 = sbr.rel (%p196) target = $region40
    $region39: #{tpu_custom_call.1} parent=5 // pred_region
      %s200 = ssub.s32 %s11, 1
      %p201 = scmp.lt.s32.totalorder %s16, 1
      %s202 = scalar_select %p201, %s16, 1
      %s203 = smul.addr %s202, 8
      %s204 = scalar_lea.vmem %s0, %s203
      %p205 = pneg %p37
      %p206 = pneg %p34
      %p207 = pneg %p58
      %p208 = pneg %p55
      %p209 = scmp.lt.s32.totalorder %s16, 1
      %s210 = scalar_select %p209, %s16, 1
      %s211 = smul.addr %s210, 8
      %s212 = scalar_lea.vmem %s2, %s211
      %p213 = pneg %p84
      %p214 = pneg %p81
      %p215 = pneg %p105
      %p216 = pneg %p102
      %p217 = pneg %p126
      %p218 = pneg %p123
      %p219 = pneg %p152
      %p220 = pneg %p149
      %p221 = scmp.lt.s32.totalorder %s16, 1
      %s222 = scalar_select %p221, %s16, 1
      %s223 = scalar_lea.vmem %s5, %s222
      %p224 = scmp.lt.s32.totalorder %s16, 1
      %s225 = scalar_select %p224, %s16, 1
      %s226 = smul.addr %s225, 8
      %s227 = scalar_lea.vmem %s0, %s226
      %p228 = scmp.lt.s32.totalorder %s16, 1
      %s229 = scalar_select %p228, %s16, 1
      %s230 = smul.addr %s229, 8
      %s231 = scalar_lea.vmem %s2, %s230
      %p232 = scmp.lt.s32.totalorder %s16, 1
      %s233 = scalar_select %p232, %s16, 1
      %s234 = scalar_lea.vmem %s5, %s233
      %v236 = vld [vmem:[%s227] sm:$0xff]
      %v237 = vmul.f32 %v236, 14.285714
      %v238 = vpack.c.bf16 %v237, %v237
      %v239 = vld [vmem:[%s1] sm:$0xf]
      %v240 = vld [vmem:[%s1 + $0x4] sm:$0xf]
      %v241 = vld [vmem:[%s1 + $0x8] sm:$0xf]
      %v242 = vld [vmem:[%s1 + $0xc] sm:$0xf]
      %v247 = vunpack.c.l.b16 %v239
      %v248 = vunpack.c.l.b16 %v240
      %v249 = vunpack.c.l.b16 %v241
      %v250 = vunpack.c.l.b16 %v242
      %v251 = vpack.c.b16 %v248, %v247
      %v252 = vpack.c.b16 %v250, %v249
      %vm255 = vcmask 261120
      %v257 = vsel %vm255, %v238, 0
      %259 = vmatpush.bf16.msra.mxu0 0
      %260 = vmatpush.bf16.msra.mxu0 0
      %261 = vmatpush.bf16.msra.mxu0 0
      %262 = vmatpush.bf16.msra.mxu0 0
      %263 = vmatpush.bf16.msra.mxu0 0
      %264 = vmatpush.bf16.msra.mxu0 0
      %265 = vmatpush.bf16.msra.mxu0 %v252
      %266 = vmatpush.bf16.msra.mxu0 %v251
      %267 = vmatmul.bf16.gmra.mxu0 %v257
      %v268 = vpop.f32.mrf.mxu0
      %v269 = vadd.f32 0.0, %v268
      %v270 = vpop.f32.mrf.mxu0
      %271 = vdwg.mxu0
      %v272 = vld [vmem:[%s231] sm:$0xff]
      %v273 = vld [vmem:[%s3] sm:$0x1]
      %274 = vset.pattern.permute.xlu0 0
      %275 = vperm.xlu0 %274, %v272
      %v276 = vpop.permute.xlu0 %275
      %v277 = vperm.slane %v273, 0
      %vm278 = vcmp.eq.s32.totalorder %v276, %v277
      %vm279 = vmxor %vm278, 1
      %s280 = smul.u32 %s16, 8
      %v281 = vlaneseq
      %v282 = vshrl.u32 %v281, 7
      %v283 = vstv %s280
      %v284 = vadd.s32 %v282, %v283
      %v285 = vlaneseq
      %v286 = vand.u32 %v285, 127
      %vm287 = vcmp.ne.s32.totalorder %v284, %v286
      %vm288 = vmand %vm278, %vm287
      %v289 = vsel %vm279, %v269, -inf
      %vm290 = vcmask 130048
      %v291 = vsel %vm290, %v289, -inf
      %292 = vmax.xlane.f32.xlu0 %v291
      %v293 = vpop.xlane.xlu0 %292
      %vm294 = vcmp.eq.f32.partialorder %v293, -inf
      %v295 = vsel %vm294, 0.0, %v293
      %v296 = vsub.f32 %v289, %v295
      %v297 = vmul.f32 %v296, 1.442695
      %v298 = vpow.pop %v297
      %v299 = vsel %vm290, %v298, 0.0
      %300 = vadd.xlane.f32.xlu0 %v299
      %v301 = vpop.xlane.xlu0 %300
      %v302 = vlog2.pop %v301
      %v303 = vmul.f32 %v302, 0.6931472
      %v304 = vadd.f32 %v295, %v303
      %v305 = vsub.f32 %v269, 0.25
      %v306 = vmax.f32 %v305, %v304
      %v307 = vmin.f32 %v305, %v304
      %v308 = vsub.f32 %v307, %v306
      %v309 = vmul.f32 %v308, 1.442695
      %v310 = vpow.pop %v309
      %v311 = vadd.f32 %v310, 1.0
      %v312 = vlog2.pop %v311
      %v313 = vmul.f32 %v312, 0.6931472
      %v314 = vadd.f32 %v306, %v313
      %v315 = vsub.f32 %v314, %v269
      %v316 = vsel %vm288, %v315, 0.0
      %v317 = vsel %vm290, %v316, 0.0
      %v318 = vrot.slane %v317, 4
      %v319 = vadd.f32 %v317, %v318
      %v320 = vrot.slane %v319, 2
      %v321 = vadd.f32 %v319, %v320
      %v322 = vrot.slane %v321, 1
      %v323 = vadd.f32 %v321, %v322
      %v324 = vld [vmem:[%s4] sm:$0x1]
      %v325 = vmul.f32 %v323, %v324
      %vm326 = vcmask 122880
      %v327 = vsel %vm326, %v325, 0.0
      %328 = vadd.xlane.f32.xlu0 %v327
      %v329 = vpop.xlane.xlu0 %328
      %vm330 = vcmask 0
      %331 = vst.msk [vmem:[%s234] sm:$0x1] %vm330, %v329
      %p332 = scmp.lt.s32.totalorder %s16, 1
      %s333 = scalar_select %p332, %s16, 1
      %s334 = scalar_lea.vmem %s5, %s333
      // Predicated region
      $region41: #{tpu_custom_call.1} parent=39 // pred_check
        %p335 = pneg %p149
      $region42: #{tpu_custom_call.1} parent=39 // pred_check_branch
        %337 = sbr.rel (%p335) target = $region44
      $region43: #{tpu_custom_call.1} parent=39 // pred_region
        _
      $region44: #{tpu_custom_call.1} parent=39 // pred_fallthru
        _
    $region40: #{tpu_custom_call.1} parent=5 // pred_fallthru
      _
    %p338 = scmp.le.s32.totalorder 2, %s11
    // Predicated region
    $region45: #{tpu_custom_call.1} parent=5 // pred_check
      %p339 = pneg %p338
    $region46: #{tpu_custom_call.1} parent=5 // pred_check_branch
      %341 = sbr.rel (%p339) target = $region48
    $region47: #{tpu_custom_call.1} parent=5 // pred_region
      %s342 = ssub.s32 %s11, 2
      // Predicated region
      $region49: #{tpu_custom_call.1} parent=47 // pred_check
        %p343 = pneg %p155
      $region50: #{tpu_custom_call.1} parent=47 // pred_check_branch
        %345 = sbr.rel (%p343) target = $region52
      $region51: #{tpu_custom_call.1} parent=47 // pred_region
        %p346 = scmp.lt.s32.totalorder %s17, 1
        %s347 = scalar_select %p346, %s17, 1
        %s348 = scalar_lea.vmem %s5, %s347
      $region52: #{tpu_custom_call.1} parent=47 // pred_fallthru
        _
    $region48: #{tpu_custom_call.1} parent=5 // pred_fallthru
      _
  $region6: #{tpu_custom_call.1} parent=0 // loop_footer
    %s15 = sadd.s32 1, %s11
  $region7: #{tpu_custom_call.1} parent=0 // loop_footer_branch
    %10 = sbr.rel target = $region3
  $region8: #{tpu_custom_call.1} parent=0 // loop_exit
    _

</llo_original>
